<compile_context>
chip_gen: v5e
topology: v5e:2x2
jax: 0.10.0
libtpu: 0.0.40
codegen_flags: <defaults>
</compile_context>

<pallas_src>
import functools
import math

import jax
import jax.numpy as jnp
from jax.experimental import pallas as pl
from jax.experimental.pallas import tpu as pltpu

GAMMA = 2.0
ALPHA = 0.25
EPS = 1e-7
LOG_EPS = math.log(EPS)
LOG_1MEPS = math.log(1.0 - EPS)

LANES = 128        # vreg lane width
SUBLANES = 8       # vreg sublane count (f32)
ROW_ALIGN = 16     # tm multiple: covers f32 (8) and bf16 (16) min tiles
TM_MAX = 2048      # rows per tile: 2048*128*4B = 1 MiB / input / buffer


def _round_down(x, m):
    return (x // m) * m


def _num_parallel_cores():
    """2 TensorCores share a chip only on v7x-class parts; 1 on v5e/v6e."""
    try:
        kind = jax.devices()[0].device_kind.lower()
    except Exception:
        return 1
    return 2 if ("v7" in kind or "tpu7" in kind or "7x" in kind) else 1


def _focal_kernel(pred_ref, targ_ref, o_ref, *, gamma, alpha, tm,
                  full_blocks, has_dup):
    c = pl.program_id(0)          # core / parallel axis
    i = pl.program_id(1)          # reduction axis

    @pl.when(i == 0)
    def _():
        o_ref[...] = jnp.zeros_like(o_ref)

    def compute_and_accumulate():
        x = pred_ref[...].astype(jnp.float32)
        t = targ_ref[...].astype(jnp.float32)

        # pt = clamp(sigmoid(x), 1e-7, 1 - 1e-7)
        pt = jnp.clip(jax.nn.sigmoid(x), EPS, 1.0 - EPS)
        one_m_pt = 1.0 - pt

        # Single EUP log: log(1 - sigmoid(x)) = log(sigmoid(x)) - x; the clamp
        # on the result reproduces the reference's clamp-then-log behaviour.
        log_pt = jnp.log(pt)
        log_1mpt = jnp.clip(log_pt - x, LOG_EPS, LOG_1MEPS)

        # gamma == 2 (default): squares on the VPU instead of pow (EUP).
        if gamma == 2.0:
            ompt_g = one_m_pt * one_m_pt
            pt_g = pt * pt
        elif float(gamma).is_integer():
            ompt_g = one_m_pt ** int(gamma)     # lax.integer_pow -> multiplies
            pt_g = pt ** int(gamma)
        else:
            ompt_g = one_m_pt ** gamma
            pt_g = pt ** gamma

        # loss = -(t * a_term + (1-t) * b_term); accumulate the NEGATED loss
        # (b_term + t*(a_term - b_term)) and negate once in the wrapper.
        a_term = alpha * (ompt_g * log_pt)
        b_term = (1.0 - alpha) * (pt_g * log_1mpt)
        neg_loss = b_term + t * (a_term - b_term)

        # Fold sublane groups with plain VPU adds into the lane-shaped (8,128)
        # accumulator resident in the output block. No per-step XLU reduce.
        o_ref[0] += neg_loss.reshape(tm // SUBLANES, SUBLANES, LANES).sum(axis=0)

    if has_dup:
        # Grid has a few clamped duplicate blocks (full_blocks % ncores != 0):
        # skip all compute for them.
        blk = c * pl.num_programs(1) + i
        @pl.when(blk < full_blocks)
        def _():
            compute_and_accumulate()
    else:
        compute_and_accumulate()


def _focal_sum_flat(x, t, gamma, alpha):
    """Plain-jnp focal-loss SUM over a (small) flat tail."""
    pt = jnp.clip(jax.nn.sigmoid(x.astype(jnp.float32)), EPS, 1.0 - EPS)
    t = t.astype(jnp.float32)
    loss = (-alpha * (1.0 - pt) ** gamma * t * jnp.log(pt)
            - (1.0 - alpha) * pt ** gamma * (1.0 - t) * jnp.log(1.0 - pt))
    return jnp.sum(loss)


def bce_focal_loss(predict, target, *, gamma=GAMMA, alpha=ALPHA,
                   reduction="mean"):
    """Pallas TPU implementation of BCEFocalLoss.forward ('mean'/'sum')."""
    assert predict.shape == target.shape
    assert reduction in ("mean", "sum")
    gamma = float(gamma)
    alpha = float(alpha)
    n = int(predict.size)
    assert n > 0

    p_flat = predict.reshape(-1)
    t_flat = target.reshape(-1)

    ncores = _num_parallel_cores()
    full_rows = n // LANES                      # rows made only of valid elems
    rem = n % LANES

    # Largest tm (multiple of ROW_ALIGN, capped at TM_MAX) such that every
    # kernel block is fully valid -> zero masking / OOB handling in-kernel.
    tm = min(TM_MAX, max(ROW_ALIGN, _round_down(full_rows // ncores, ROW_ALIGN)))
    full_blocks = full_rows // tm
    n_main = full_blocks * tm * LANES           # elements handled by the kernel

    total = jnp.float32(0.0)

    if full_blocks > 0:
        if rem == 0:
            # 128-aligned sizes: reshape is a bitcast, completely copy-free.
            p2 = p_flat.reshape(full_rows, LANES)
            t2 = t_flat.reshape(full_rows, LANES)
        else:
            # Ragged sizes: one prefix copy so the stream reshapes to
            # (rows, 128).  TODO(synk): copy-free via in-kernel flat-HBM DMA.
            p2 = p_flat[:n_main].reshape(full_blocks * tm, LANES)
            t2 = t_flat[:n_main].reshape(full_blocks * tm, LANES)

        steps = pl.cdiv(full_blocks, ncores)
        grid_blocks = ncores * steps
        has_dup = grid_blocks > full_blocks

        # Clamp so duplicate grid points never issue an out-of-range block DMA.
        in_map = lambda c, i: (jnp.minimum(c * steps + i, full_blocks - 1), 0)

        kernel = functools.partial(
            _focal_kernel, gamma=gamma, alpha=alpha, tm=tm,
            full_blocks=full_blocks, has_dup=has_dup)

        partials = pl.pallas_call(
            kernel,
            out_shape=jax.ShapeDtypeStruct((ncores, SUBLANES, LANES),
                                           jnp.float32),
            grid_spec=pltpu.PrefetchScalarGridSpec(
                num_scalar_prefetch=0,
                grid=(ncores, steps),
                in_specs=[
                    pl.BlockSpec((tm, LANES), in_map),
                    pl.BlockSpec((tm, LANES), in_map),
                ],
                out_specs=pl.BlockSpec((1, SUBLANES, LANES),
                                       lambda c, i: (c, 0, 0)),
            ),
            compiler_params=pltpu.CompilerParams(
                dimension_semantics=("parallel", "arbitrary"),
                vmem_limit_bytes=32 * 1024 * 1024),
        )(p2, t2)

        # Kernel accumulates the negated loss; final reduce of the tiny
        # (ncores, 8, 128) partials array happens here.
        total = -jnp.sum(partials)

    if n_main < n:
        # Sub-block remainder (< tm rows plus a partial row): plain jnp.
        total = total + _focal_sum_flat(p_flat[n_main:], t_flat[n_main:],
                                        gamma, alpha)

    if reduction == "mean":
        return total / jnp.float32(n)
    return total


def _reference(predict, target, gamma=GAMMA, alpha=ALPHA, reduction="mean"):
    pt = jax.nn.sigmoid(predict).astype(jnp.float32)
    pt = jnp.clip(pt, 1e-7, 1.0 - 1e-7)
    t = target.astype(jnp.float32)
    loss = (-alpha * (1 - pt) ** gamma * t * jnp.log(pt)
            - (1 - alpha) * pt ** gamma * (1 - t) * jnp.log(1 - pt))
    return jnp.mean(loss) if reduction == "mean" else jnp.sum(loss)


if __name__ == "__main__":
    key = jax.random.PRNGKey(0)
    k1, k2, k3, k4 = jax.random.split(key, 4)

    # NCHW logits and binary targets, as the PyTorch module expects.
    predict = jax.random.normal(k1, (2, 4, 16, 16), dtype=jnp.float32)
    target = (jax.random.uniform(k2, (2, 4, 16, 16)) > 0.5).astype(jnp.float32)

    loss = bce_focal_loss(predict, target)
    jax.block_until_ready(loss)
    ref = _reference(predict, target)
    assert jnp.allclose(loss, ref, rtol=1e-5, atol=1e-6), (loss, ref)

    # 'sum' reduction path.
    loss_s = bce_focal_loss(predict, target, reduction="sum")
    jax.block_until_ready(loss_s)
    ref_s = _reference(predict, target, reduction="sum")
    assert jnp.allclose(loss_s, ref_s, rtol=1e-5, atol=1e-4), (loss_s, ref_s)

    # Ragged (non-128-aligned, sub-block) shape exercises the jnp-tail path.
    predict2 = jax.random.normal(k3, (2, 3, 7, 5), dtype=jnp.float32)
    target2 = (jax.random.uniform(k4, (2, 3, 7, 5)) > 0.5).astype(jnp.float32)
    loss2 = bce_focal_loss(predict2, target2)
    jax.block_until_ready(loss2)
    ref2 = _reference(predict2, target2)
    assert jnp.allclose(loss2, ref2, rtol=1e-5, atol=1e-6), (loss2, ref2)

    print("KERNEL_OK")
</pallas_src>

<mosaic_0001>
module attributes {stable_mosaic.version = 11 : i64} {
  func.func @_focal_kernel(%arg0: i32, %arg1: i32, %arg2: memref<16x128xf32, #tpu.memory_space<vmem>>, %arg3: memref<16x128xf32, #tpu.memory_space<vmem>>, %arg4: memref<1x8x128xf32, #tpu.memory_space<vmem>>) attributes {dimension_semantics = [#tpu.dimension_semantics<parallel>, #tpu.dimension_semantics<arbitrary>], iteration_bounds = array<i64: 1, 1>, scalar_prefetch = 0 : i64, scratch_operands = 0 : i64, tpu.core_type = #tpu.core_type<tc>, window_params = [{transform_indices = @transform_0, window_bounds = array<i64: 16, 128>}, {transform_indices = @transform_1, window_bounds = array<i64: 16, 128>}, {transform_indices = @transform_2, window_bounds = array<i64: 1, 8, 128>}]} {
    %c0_i32 = arith.constant 0 : i32
    %0 = arith.cmpi eq, %arg1, %c0_i32 : i32
    %1 = arith.extui %0 : i1 to i32
    %c0_i32_0 = arith.constant 0 : i32
    %2 = arith.cmpi ne, %1, %c0_i32_0 : i32
    scf.if %2 {
      %cst_18 = arith.constant 0.000000e+00 : f32
      %41 = vector.broadcast %cst_18 : f32 to vector<1x8x128xf32>
      %c0_19 = arith.constant 0 : index
      %c0_20 = arith.constant 0 : index
      %c0_21 = arith.constant 0 : index
      %42 = vector.load %arg4[%c0_19, %c0_20, %c0_21] : memref<1x8x128xf32, #tpu.memory_space<vmem>>, vector<1x8x128xf32>
      tpu.vector_store %arg4[%c0_19, %c0_20, %c0_21], %41 {strides = array<i32>} : memref<1x8x128xf32, #tpu.memory_space<vmem>>, vector<1x8x128xf32>,
    } else {
    }
    %c0 = arith.constant 0 : index
    %c0_1 = arith.constant 0 : index
    %3 = vector.load %arg2[%c0, %c0_1] : memref<16x128xf32, #tpu.memory_space<vmem>>, vector<16x128xf32>
    %c0_2 = arith.constant 0 : index
    %c0_3 = arith.constant 0 : index
    %4 = vector.load %arg3[%c0_2, %c0_3] : memref<16x128xf32, #tpu.memory_space<vmem>>, vector<16x128xf32>
    %5 = arith.negf %3 : vector<16x128xf32>
    %6 = math.exp %5 : vector<16x128xf32>
    %cst = arith.constant 1.000000e+00 : f32
    %7 = vector.broadcast %cst : f32 to vector<16x128xf32>
    %8 = arith.addf %7, %6 : vector<16x128xf32>
    %9 = arith.divf %7, %8 : vector<16x128xf32>
    %cst_4 = arith.constant 1.000000e-07 : f32
    %cst_5 = arith.constant 0.99999988 : f32
    %10 = vector.broadcast %cst_4 : f32 to vector<16x128xf32>
    %11 = arith.maximumf %10, %9 : vector<16x128xf32>
    %12 = vector.broadcast %cst_5 : f32 to vector<16x128xf32>
    %13 = arith.minimumf %12, %11 : vector<16x128xf32>
    %cst_6 = arith.constant 1.000000e+00 : f32
    %14 = vector.broadcast %cst_6 : f32 to vector<16x128xf32>
    %15 = arith.subf %14, %13 : vector<16x128xf32>
    %16 = math.log %13 : vector<16x128xf32>
    %17 = arith.subf %16, %3 : vector<16x128xf32>
    %cst_7 = arith.constant -16.1180954 : f32
    %cst_8 = arith.constant -1.00000008E-7 : f32
    %18 = vector.broadcast %cst_7 : f32 to vector<16x128xf32>
    %19 = arith.maximumf %18, %17 : vector<16x128xf32>
    %20 = vector.broadcast %cst_8 : f32 to vector<16x128xf32>
    %21 = arith.minimumf %20, %19 : vector<16x128xf32>
    %22 = arith.mulf %15, %15 : vector<16x128xf32>
    %23 = arith.mulf %13, %13 : vector<16x128xf32>
    %24 = arith.mulf %22, %16 : vector<16x128xf32>
    %cst_9 = arith.constant 2.500000e-01 : f32
    %25 = vector.broadcast %cst_9 : f32 to vector<16x128xf32>
    %26 = arith.mulf %25, %24 : vector<16x128xf32>
    %27 = arith.mulf %23, %21 : vector<16x128xf32>
    %cst_10 = arith.constant 7.500000e-01 : f32
    %28 = vector.broadcast %cst_10 : f32 to vector<16x128xf32>
    %29 = arith.mulf %28, %27 : vector<16x128xf32>
    %30 = arith.subf %26, %29 : vector<16x128xf32>
    %31 = arith.mulf %4, %30 : vector<16x128xf32>
    %32 = arith.addf %29, %31 : vector<16x128xf32>
    %c0_11 = arith.constant 0 : index
    %c0_12 = arith.constant 0 : index
    %c0_13 = arith.constant 0 : index
    %33 = vector.load %arg4[%c0_11, %c0_12, %c0_13] : memref<1x8x128xf32, #tpu.memory_space<vmem>>, vector<1x8x128xf32>
    %34 = vector.shape_cast %33 : vector<1x8x128xf32> to vector<8x128xf32>
    %35 = vector.shape_cast %32 : vector<16x128xf32> to vector<2x8x128xf32>
    %cst_14 = arith.constant dense<0.000000e+00> : vector<8x128xf32>
    %36 = vector.multi_reduction <add>, %35, %cst_14 [0] : vector<2x8x128xf32> to vector<8x128xf32>
    %37 = arith.addf %34, %36 : vector<8x128xf32>
    %c0_15 = arith.constant 0 : index
    %c0_16 = arith.constant 0 : index
    %c0_17 = arith.constant 0 : index
    %38 = vector.load %arg4[%c0_15, %c0_16, %c0_17] : memref<1x8x128xf32, #tpu.memory_space<vmem>>, vector<1x8x128xf32>
    %39 = vector.shape_cast %38 : vector<1x8x128xf32> to vector<8x128xf32>
    %40 = vector.shape_cast %37 : vector<8x128xf32> to vector<1x8x128xf32>
    tpu.vector_store %arg4[%c0_15, %c0_16, %c0_17], %40 {strides = array<i32>} : memref<1x8x128xf32, #tpu.memory_space<vmem>>, vector<1x8x128xf32>,
    return
  }
  func.func @transform_0(%arg0: i32, %arg1: i32) -> (i32, i32) {
    %c1_i32 = arith.constant 1 : i32
    %0 = arith.muli %arg0, %c1_i32 : i32
    %1 = arith.addi %0, %arg1 : i32
    %c0_i32 = arith.constant 0 : i32
    %2 = arith.minsi %1, %c0_i32 : i32
    %c0_i32_0 = arith.constant 0 : i32
    %c0_i32_1 = arith.constant 0 : i32
    return %2, %c0_i32_0 : i32, i32
  }
  func.func @transform_1(%arg0: i32, %arg1: i32) -> (i32, i32) {
    %c1_i32 = arith.constant 1 : i32
    %0 = arith.muli %arg0, %c1_i32 : i32
    %1 = arith.addi %0, %arg1 : i32
    %c0_i32 = arith.constant 0 : i32
    %2 = arith.minsi %1, %c0_i32 : i32
    %c0_i32_0 = arith.constant 0 : i32
    %c0_i32_1 = arith.constant 0 : i32
    return %2, %c0_i32_0 : i32, i32
  }
  func.func @transform_2(%arg0: i32, %arg1: i32) -> (i32, i32, i32) {
    %c0_i32 = arith.constant 0 : i32
    %c0_i32_0 = arith.constant 0 : i32
    %c0_i32_1 = arith.constant 0 : i32
    return %arg0, %c0_i32, %c0_i32_0 : i32, i32, i32
  }
}

</mosaic_0001>

<llo_original>
// kernel: tpu_custom_call.1
$region0: #{tpu_custom_call.1}
  #allocation0 [shape = 'u32[]', space=smem, size = 0x4, offset = 0x4, fixed_abs, tag = 'smem constant byte address 0x4 - core index']
  #allocation1 [shape = 'u32[72,128]{1,0:T(1,128)}', space=vmem, size = 0x9000, scoped, tag = 'internal scratch']
  %s0 = inlined_call_operand.hbm [shape: f32[16,128], index: 0, kind: input, shape index: {}]
  %s1 = inlined_call_operand.hbm [shape: f32[16,128], index: 1, kind: input, shape index: {}]
  %s2 = inlined_call_operand.hbm [shape: f32[1,8,128], index: 2, kind: output, shape index: {}]
  %s3 = sld [smem:[#allocation0]]
  $region30: #{tpu_custom_call.1} parent=0
    _
  %s5 = ssub.s32 1, %s3
  %s6 = scalar_select 0, %s5, %s3
  $region1: #{tpu_custom_call.1} parent=0
    #allocation2 [shape = 'u8[8192]{0}', space=vmem, size = 0x2000, scoped, tag = 'input window, operand 0, single buffered']
    #allocation3 [shape = 's32[1]{0}', space=sflag, size = 0x4, scoped, tag = 'scoped memory for tpu_custom_call.1']
    #allocation4 [shape = 's32[1]{0}', space=sflag, size = 0x4, scoped, tag = 'scoped memory for tpu_custom_call.1']
    #allocation5 [shape = 'u8[8192]{0}', space=vmem, size = 0x2000, scoped, tag = 'input window, operand 1, single buffered']
    #allocation6 [shape = 's32[1]{0}', space=sflag, size = 0x4, scoped, tag = 'scoped memory for tpu_custom_call.1']
    #allocation7 [shape = 'u8[4096]{0}', space=vmem, size = 0x1000, scoped, tag = 'output window, operand 0, single buffered']
    %7 = vsyncpa [#allocation3], 0
    %8 = vsyncpa [#allocation6], 0
    %9 = vsyncpa [#allocation4], 0
    // Predicated region
    $region2: #{tpu_custom_call.1} parent=1 // pred_check
      _
    $region3: #{tpu_custom_call.1} parent=1 // pred_check_branch
      %11 = sbr.rel (0) target = $region5
    $region4: #{tpu_custom_call.1} parent=1 // pred_region
      %s12 = sadd.s32 0, 0
      %p13 = scmp.lt.s32.totalorder %s12, 0
      %s14 = scalar_select %p13, %s12, 0
      %s15 = smul.u32 2, %s14
      %17 = vsyncadd [#allocation3], 0
      %s18 = smul.addr %s15, 8
      %s19 = scalar_lea.hbm %s0, %s18
      %s20 = sshll.u32 %s19, 4
      %s21 = int_to_ptr.hbm [resolvable:$true] %s20
      %s22 = sshll.u32 [#allocation2], 4
      %s23 = int_to_ptr.vmem [resolvable:$true] %s22
      %28 = dma.hbm_to_vmem [thread:$0]  %s21, 256, %s23, [#allocation3], 128, 128, 8
    $region5: #{tpu_custom_call.1} parent=1 // pred_fallthru
      _
    // Predicated region
    $region6: #{tpu_custom_call.1} parent=1 // pred_check
      _
    $region7: #{tpu_custom_call.1} parent=1 // pred_check_branch
      %30 = sbr.rel (0) target = $region9
    $region8: #{tpu_custom_call.1} parent=1 // pred_region
      %s31 = sadd.s32 0, 0
      %p32 = scmp.lt.s32.totalorder %s31, 0
      %s33 = scalar_select %p32, %s31, 0
      %s34 = smul.u32 2, %s33
      %36 = vsyncadd [#allocation6], 0
      %s37 = smul.addr %s34, 8
      %s38 = scalar_lea.hbm %s1, %s37
      %s39 = sshll.u32 %s38, 4
      %s40 = int_to_ptr.hbm [resolvable:$true] %s39
      %s41 = sshll.u32 [#allocation5], 4
      %s42 = int_to_ptr.vmem [resolvable:$true] %s41
      %47 = dma.hbm_to_vmem [thread:$0]  %s40, 256, %s42, [#allocation6], 128, 128, 8
    $region9: #{tpu_custom_call.1} parent=1 // pred_fallthru
      _
    // Predicated region
    $region10: #{tpu_custom_call.1} parent=1 // pred_check
      _
    $region11: #{tpu_custom_call.1} parent=1 // pred_check_branch
      %49 = sbr.rel (0) target = $region13
    $region12: #{tpu_custom_call.1} parent=1 // pred_region
      %51 = dma.done [#allocation3], 256
    $region13: #{tpu_custom_call.1} parent=1 // pred_fallthru
      _
    // Predicated region
    $region14: #{tpu_custom_call.1} parent=1 // pred_check
      _
    $region15: #{tpu_custom_call.1} parent=1 // pred_check_branch
      %53 = sbr.rel (0) target = $region17
    $region16: #{tpu_custom_call.1} parent=1 // pred_region
      %55 = dma.done [#allocation6], 256
    $region17: #{tpu_custom_call.1} parent=1 // pred_fallthru
      _
    %s56 = sadd.s32 0, 0
    %p57 = scmp.lt.s32.totalorder %s56, 0
    %s58 = scalar_select %p57, %s56, 0
    %s59 = smul.u32 2, %s58
    %s60 = sadd.s32 0, 0
    %p61 = scmp.lt.s32.totalorder %s60, 0
    %s62 = scalar_select %p61, %s60, 0
    %s63 = smul.u32 2, %s62
    %p64 = scmp.eq.s32.totalorder 0, 0
    // Predicated region
    $region18: #{tpu_custom_call.1} parent=1 // pred_check
      %p65 = pneg %p64
    $region19: #{tpu_custom_call.1} parent=1 // pred_check_branch
      %67 = sbr.rel (%p65) target = $region21
    $region20: #{tpu_custom_call.1} parent=1 // pred_region
      %68 = vst [vmem:[#allocation7] sm:$0xff] 0.0
    $region21: #{tpu_custom_call.1} parent=1 // pred_fallthru
      _
    %v69 = vld [vmem:[#allocation2] sm:$0xff]
    %v70 = vld [vmem:[#allocation2 + $0x8] sm:$0xff]
    %v71 = vld [vmem:[#allocation5] sm:$0xff]
    %v72 = vld [vmem:[#allocation5 + $0x8] sm:$0xff]
    %v73 = vxor.u32 %v69, 2147483648
    %v74 = vxor.u32 %v70, 2147483648
    %v75 = vmul.f32 %v73, 1.442695
    %v76 = vpow.pop %v75
    %v77 = vmul.f32 %v74, 1.442695
    %v78 = vpow.pop %v77
    %v79 = vadd.f32 %v76, 1.0
    %v80 = vadd.f32 %v78, 1.0
    %v81 = vrcp.pop %v79
    %v82 = vmul.f32 %v79, %v81
    %v83 = vsub.f32 1.0, %v82
    %v84 = vmul.f32 %v81, %v83
    %v85 = vadd.f32 %v81, %v84
    %vm86 = vweird.f32 %v79
    %vm87 = vweird.f32 %v81
    %vm88 = vmor %vm86, %vm87
    %v89 = vsel %vm88, %v81, %v85
    %v90 = vand.u32 2147483647, %v79
    %vm91 = vcmp.eq.f32.partialorder %v90, 8.507059e+37
    %v92 = vand.u32 %v79, 2147483648
    %v93 = vor.u32 1.1754944e-38, %v92
    %v94 = vsel %vm91, %v93, %v89
    %v95 = vmul.f32 1.0, %v94
    %v96 = vrcp.pop %v80
    %v97 = vmul.f32 %v80, %v96
    %v98 = vsub.f32 1.0, %v97
    %v99 = vmul.f32 %v96, %v98
    %v100 = vadd.f32 %v96, %v99
    %vm101 = vweird.f32 %v80
    %vm102 = vweird.f32 %v96
    %vm103 = vmor %vm101, %vm102
    %v104 = vsel %vm103, %v96, %v100
    %v105 = vand.u32 2147483647, %v80
    %vm106 = vcmp.eq.f32.partialorder %v105, 8.507059e+37
    %v107 = vand.u32 %v80, 2147483648
    %v108 = vor.u32 1.1754944e-38, %v107
    %v109 = vsel %vm106, %v108, %v104
    %v110 = vmul.f32 1.0, %v109
    %v111 = vmax.f32 %v95, 1e-07
    %v112 = vmax.f32 %v110, 1e-07
    %v113 = vmin.f32 %v111, 0.9999999
    %v114 = vmin.f32 %v112, 0.9999999
    %v115 = vsub.f32 1.0, %v113
    %v116 = vsub.f32 1.0, %v114
    %v117 = vlog2.pop %v113
    %v118 = vmul.f32 %v117, 0.6931472
    %v119 = vlog2.pop %v114
    %v120 = vmul.f32 %v119, 0.6931472
    %v121 = vsub.f32 %v118, %v69
    %v122 = vsub.f32 %v120, %v70
    %v123 = vmax.f32 %v121, -16.118095
    %v124 = vmax.f32 %v122, -16.118095
    %v125 = vmin.f32 %v123, -1.0000001e-07
    %v126 = vmin.f32 %v124, -1.0000001e-07
    %v127 = vmul.f32 %v115, %v115
    %v128 = vmul.f32 %v116, %v116
    %v129 = vmul.f32 %v113, %v113
    %v130 = vmul.f32 %v114, %v114
    %v131 = vmul.f32 %v127, %v118
    %v132 = vmul.f32 %v128, %v120
    %v133 = vmul.f32 %v131, 0.25
    %v134 = vmul.f32 %v132, 0.25
    %v135 = vmul.f32 %v129, %v125
    %v136 = vmul.f32 %v130, %v126
    %v137 = vmul.f32 %v135, 0.75
    %v138 = vmul.f32 %v136, 0.75
    %v139 = vsub.f32 %v133, %v137
    %v140 = vsub.f32 %v134, %v138
    %v141 = vmul.f32 %v71, %v139
    %v142 = vmul.f32 %v72, %v140
    %v143 = vadd.f32 %v137, %v141
    %v144 = vadd.f32 %v138, %v142
    %v145 = vld [vmem:[#allocation7] sm:$0xff]
    %v146 = vadd.f32 %v143, %v144
    %v147 = vadd.f32 %v145, %v146
    %148 = vst [vmem:[#allocation7] sm:$0xff] %v147
    // Predicated region
    $region22: #{tpu_custom_call.1} parent=1 // pred_check
      _
    $region23: #{tpu_custom_call.1} parent=1 // pred_check_branch
      %150 = sbr.rel (0) target = $region25
    $region24: #{tpu_custom_call.1} parent=1 // pred_region
      %152 = vsyncadd [#allocation4], 0
      %s154 = sshll.u32 [#allocation7], 4
      %s155 = int_to_ptr.vmem [resolvable:$true] %s154
      %s156 = sshll.u32 %s2, 4
      %s157 = int_to_ptr.hbm [resolvable:$true] %s156
      %159 = dma.vmem_to_hbm [thread:$0]  %s155, 128, %s157, [#allocation4]
    $region25: #{tpu_custom_call.1} parent=1 // pred_fallthru
      _
    // Predicated region
    $region26: #{tpu_custom_call.1} parent=1 // pred_check
      _
    $region27: #{tpu_custom_call.1} parent=1 // pred_check_branch
      %161 = sbr.rel (0) target = $region29
    $region28: #{tpu_custom_call.1} parent=1 // pred_region
      %163 = dma.done [#allocation4], 128
    $region29: #{tpu_custom_call.1} parent=1 // pred_fallthru
      _
    %164 = vsyncpa [#allocation3], 1
    %165 = vsyncpa [#allocation6], 1
    %166 = vsyncpa [#allocation4], 1

</llo_original>
